<compile_context>
chip_gen: v7x
topology: tpu7x:2x2x1
jax: 0.10.0
libtpu: 0.0.40
codegen_flags: <defaults>
</compile_context>

<pallas_src>
import jax
import jax.numpy as jnp
import numpy as np
from jax import lax
from jax.experimental import pallas as pl
from jax.experimental.pallas import tpu as pltpu


# ----------------------- packed-parameter row layout ----------------------- #
def _round_up8(x):
    return (x + 7) // 8 * 8


def _param_layout(E, H, C):
    """Static row offsets of each parameter inside the packed [R, 3H] blob."""
    offs = {}
    r = 0
    offs["wf"] = r;   r += E        # fused (We @ Wih)            [E, 3H]
    offs["bf"] = r;   r += 1        # fused bias (be@Wih + bih)   [1, 3H]
    r = _round_up8(r)
    offs["whh"] = r;  r += H        # GRU hidden weights          [H, 3H]
    offs["bhh"] = r;  r += 1        # GRU hidden bias             [1, 3H]
    r = _round_up8(r)
    offs["w1"] = r;   r += H        # value MLP layer 1           [H, H] in cols 0:H
    offs["b1"] = r;   r += 1        #                             [1, H]
    r = _round_up8(r)
    offs["w2"] = r;   r += H        # value MLP layer 2           [H, H]
    offs["b2"] = r;   r += 1        #                             [1, H]
    offs["w3"] = r;   r += 1        # final Linear(H->1) as row   [1, H]
    offs["b3"] = r;   r += 1        # scalar at [0, 0]            [1, 1]
    r = _round_up8(r)
    offs["mask"] = r; r += C        # per-clause step mask        [C, T] in cols 0:T
    return offs, _round_up8(r)


# ----------------------------- Pallas kernel ------------------------------ #
def decoder_kernel(tok_ref, h0_ref, p_ref, out_ref):
    T, C, E = tok_ref.shape
    H = h0_ref.shape[1]
    offs, _ = _param_layout(E, H, C)

    # Static slices of the packed parameter blob (free views / cheap loads).
    wf   = p_ref[offs["wf"]:offs["wf"] + E, :]            # [E, 3H]
    bf   = p_ref[offs["bf"]:offs["bf"] + 1, :]            # [1, 3H]
    whh  = p_ref[offs["whh"]:offs["whh"] + H, :]          # [H, 3H]
    bhh  = p_ref[offs["bhh"]:offs["bhh"] + 1, :]          # [1, 3H]
    w1   = p_ref[offs["w1"]:offs["w1"] + H, 0:H]          # [H, H]
    b1   = p_ref[offs["b1"]:offs["b1"] + 1, 0:H]          # [1, H]
    w2   = p_ref[offs["w2"]:offs["w2"] + H, 0:H]          # [H, H]
    b2   = p_ref[offs["b2"]:offs["b2"] + 1, 0:H]          # [1, H]
    w3r  = p_ref[offs["w3"]:offs["w3"] + 1, 0:H]          # [1, H]
    b3   = p_ref[offs["b3"]:offs["b3"] + 1, 0:1]          # [1, 1]
    mask = p_ref[offs["mask"]:offs["mask"] + C, 0:T]      # [C, T]

    # gi depends only on the tokens -> hoist it out of the recurrence as one
    # [T*C, E] x [E, 3H] matmul (embedding Linear already folded into wf/bf).
    gi_all = jnp.dot(tok_ref[...].reshape(T * C, E), wf,
                     preferred_element_type=jnp.float32) + bf     # [T*C, 3H]

    # Every clause starts from the same global state; run the GRU recurrence
    # batched over clauses; the mask freezes h for 2-token clauses at t=2.
    h = jnp.broadcast_to(h0_ref[...], (C, H))                     # [C, H]
    for t in range(T):                                            # unrolled (T=3)
        gi = gi_all[t * C:(t + 1) * C, :]                         # [C, 3H]
        gh = jnp.dot(h, whh, preferred_element_type=jnp.float32) + bhh
        # PyTorch GRUCell gate order: r, z, n
        r = jax.nn.sigmoid(gi[:, 0:H] + gh[:, 0:H])
        z = jax.nn.sigmoid(gi[:, H:2 * H] + gh[:, H:2 * H])
        n = jnp.tanh(gi[:, 2 * H:3 * H] + r * gh[:, 2 * H:3 * H])
        h_new = (1.0 - z) * n + z * h
        h = jnp.where(mask[:, t:t + 1] > 0.5, h_new, h)

    # value head: Linear -> ReLU -> Linear -> ReLU -> Linear(H->1)
    v = jnp.maximum(
        jnp.dot(h, w1, preferred_element_type=jnp.float32) + b1, 0.0)
    v = jnp.maximum(
        jnp.dot(v, w2, preferred_element_type=jnp.float32) + b2, 0.0)
    # Final Linear(H->1) emitted as a lane-dense [1, C] row:
    # contract H of w3r [1,H] with H of v [C,H]  ->  [1, C].
    val = lax.dot_general(w3r, v, (((1,), (1,)), ((), ())),
                          preferred_element_type=jnp.float32)
    out_ref[...] = val + b3                                       # [1, C]


# ------------------------------- wrapper ----------------------------------- #
def _pack_params(mask, params, E, H, C, T):
    """Fuse the embedding Linear into the GRU ih weights and pack everything
    (plus the step mask) into a single [R, 3H] f32 blob."""
    (we, be, wih, whh, bih, bhh, w1, b1, w2, b2, w3, b3) = params
    H3 = 3 * H
    wf = we @ wih                      # [E, 3H]
    bf = be @ wih + bih                # [1, 3H]

    offs, total = _param_layout(E, H, C)
    blob = jnp.zeros((total, H3), jnp.float32)
    blob = blob.at[offs["wf"]:offs["wf"] + E, :].set(wf)
    blob = blob.at[offs["bf"]:offs["bf"] + 1, :].set(bf)
    blob = blob.at[offs["whh"]:offs["whh"] + H, :].set(whh)
    blob = blob.at[offs["bhh"]:offs["bhh"] + 1, :].set(bhh)
    blob = blob.at[offs["w1"]:offs["w1"] + H, 0:H].set(w1)
    blob = blob.at[offs["b1"]:offs["b1"] + 1, 0:H].set(b1)
    blob = blob.at[offs["w2"]:offs["w2"] + H, 0:H].set(w2)
    blob = blob.at[offs["b2"]:offs["b2"] + 1, 0:H].set(b2)
    blob = blob.at[offs["w3"]:offs["w3"] + 1, 0:H].set(w3.T)
    blob = blob.at[offs["b3"]:offs["b3"] + 1, 0:1].set(b3)
    blob = blob.at[offs["mask"]:offs["mask"] + C, 0:T].set(mask)
    return blob


def global_decoder_forward(tokens, mask, h0, params):
    """tokens: [3, C, E], mask: [C, 3], h0: [1, H]  ->  values [1, C]."""
    T, C, E = tokens.shape
    H = h0.shape[1]
    blob = _pack_params(mask, params, E, H, C, T)
    vmem = pl.BlockSpec(memory_space=pltpu.MemorySpace.VMEM)
    return pl.pallas_call(
        decoder_kernel,
        out_shape=jax.ShapeDtypeStruct((1, C), jnp.float32),
        in_specs=[vmem, vmem, vmem],
        out_specs=vmem,
    )(tokens, h0, blob)                                   # already [1, C]


# --------------------------- pure-JAX reference ---------------------------- #
def reference_forward(tokens, mask, h0, params):
    (we, be, wih, whh, bih, bhh, w1, b1, w2, b2, w3, b3) = params
    T, C, _ = tokens.shape
    H = h0.shape[1]
    h = jnp.broadcast_to(h0, (C, H))
    for t in range(T):
        x = tokens[t] @ we + be
        gi = x @ wih + bih
        gh = h @ whh + bhh
        r = jax.nn.sigmoid(gi[:, 0:H] + gh[:, 0:H])
        z = jax.nn.sigmoid(gi[:, H:2 * H] + gh[:, H:2 * H])
        n = jnp.tanh(gi[:, 2 * H:3 * H] + r * gh[:, 2 * H:3 * H])
        h_new = (1.0 - z) * n + z * h
        m = mask[:, t:t + 1]
        h = jnp.where(m > 0.5, h_new, h)
    v = jnp.maximum(h @ w1 + b1, 0.0)
    v = jnp.maximum(v @ w2 + b2, 0.0)
    v = v @ w3 + b3
    return v.reshape(1, C)


# --------------------------------- main ------------------------------------ #
if __name__ == "__main__":
    H = 32          # hidden_dim
    E = 16          # raw encoder embedding dim (input to embedding_layer)
    C = 8           # number of clauses (actions)
    T = 3           # max tokens per clause (3 for 'behind'/'right', else 2)

    key = jax.random.PRNGKey(0)
    ks = jax.random.split(key, 16)

    def init(k, shape, scale=0.1):
        return (scale * jax.random.normal(k, shape)).astype(jnp.float32)

    # raw encoder embeddings per clause token, time-major: [T, C, E]
    tokens = init(ks[0], (T, C, E), scale=1.0)
    # mask: clauses alternate between 3-token ('behind'/'right') and 2-token
    n_steps = np.array([3 if i % 2 == 0 else 2 for i in range(C)], np.int32)
    mask = jnp.asarray(
        (np.arange(T)[None, :] < n_steps[:, None]).astype(np.float32))  # [C, T]
    # global graph embedding (self.state): [1, H]
    h0 = init(ks[1], (1, H), scale=1.0)

    # embedding_layer: Linear(E, H)  -> stored transposed as [E, H]
    we = init(ks[2], (E, H)); be = init(ks[3], (1, H))
    # GRUCell(H, H): weight_ih [3H, H], weight_hh [3H, H] -> stored transposed
    wih = init(ks[4], (H, 3 * H)); whh = init(ks[5], (H, 3 * H))
    bih = init(ks[6], (1, 3 * H)); bhh = init(ks[7], (1, 3 * H))
    # value_layer: Linear(H,H) -> ReLU -> Linear(H,H) -> ReLU -> Linear(H,1)
    w1 = init(ks[8], (H, H)); b1 = init(ks[9], (1, H))
    w2 = init(ks[10], (H, H)); b2 = init(ks[11], (1, H))
    w3 = init(ks[12], (H, 1)); b3 = init(ks[13], (1, 1))

    params = (we, be, wih, whh, bih, bhh, w1, b1, w2, b2, w3, b3)

    values = global_decoder_forward(tokens, mask, h0, params)
    values = jax.block_until_ready(values)

    expected = reference_forward(tokens, mask, h0, params)
    np.testing.assert_allclose(np.asarray(values), np.asarray(expected),
                               rtol=1e-5, atol=1e-5)
    assert values.shape == (1, C)
    print("KERNEL_OK")
</pallas_src>

<mosaic_0001>
module attributes {stable_mosaic.version = 11 : i64} {
  func.func @decoder_kernel(%arg0: memref<3x8x16xf32, #tpu.memory_space<vmem>>, %arg1: memref<1x32xf32, #tpu.memory_space<vmem>>, %arg2: memref<152x96xf32, #tpu.memory_space<vmem>>, %arg3: memref<1x8xf32, #tpu.memory_space<vmem>>) attributes {dimension_semantics = [], scalar_prefetch = 0 : i64, scratch_operands = 0 : i64, tpu.core_type = #tpu.core_type<tc>} {
    %c0 = arith.constant 0 : index
    %c0_0 = arith.constant 0 : index
    %0 = vector.load %arg2[%c0, %c0_0] : memref<152x96xf32, #tpu.memory_space<vmem>>, vector<16x96xf32>
    %c16 = arith.constant 16 : index
    %c0_1 = arith.constant 0 : index
    %1 = vector.load %arg2[%c16, %c0_1] : memref<152x96xf32, #tpu.memory_space<vmem>>, vector<1x96xf32>
    %c24 = arith.constant 24 : index
    %c0_2 = arith.constant 0 : index
    %2 = vector.load %arg2[%c24, %c0_2] : memref<152x96xf32, #tpu.memory_space<vmem>>, vector<32x96xf32>
    %c56 = arith.constant 56 : index
    %c0_3 = arith.constant 0 : index
    %3 = vector.load %arg2[%c56, %c0_3] : memref<152x96xf32, #tpu.memory_space<vmem>>, vector<1x96xf32>
    %c64 = arith.constant 64 : index
    %c0_4 = arith.constant 0 : index
    %4 = vector.load %arg2[%c64, %c0_4] : memref<152x96xf32, #tpu.memory_space<vmem>>, vector<32x32xf32>
    %c96 = arith.constant 96 : index
    %c0_5 = arith.constant 0 : index
    %5 = vector.load %arg2[%c96, %c0_5] : memref<152x96xf32, #tpu.memory_space<vmem>>, vector<1x32xf32>
    %c104 = arith.constant 104 : index
    %c0_6 = arith.constant 0 : index
    %6 = vector.load %arg2[%c104, %c0_6] : memref<152x96xf32, #tpu.memory_space<vmem>>, vector<32x32xf32>
    %c136 = arith.constant 136 : index
    %c0_7 = arith.constant 0 : index
    %7 = vector.load %arg2[%c136, %c0_7] : memref<152x96xf32, #tpu.memory_space<vmem>>, vector<1x32xf32>
    %c137 = arith.constant 137 : index
    %c0_8 = arith.constant 0 : index
    %8 = vector.load %arg2[%c137, %c0_8] : memref<152x96xf32, #tpu.memory_space<vmem>>, vector<1x32xf32>
    %c138 = arith.constant 138 : index
    %c0_9 = arith.constant 0 : index
    %9 = vector.load %arg2[%c138, %c0_9] : memref<152x96xf32, #tpu.memory_space<vmem>>, vector<1x1xf32>
    %c144 = arith.constant 144 : index
    %c0_10 = arith.constant 0 : index
    %10 = vector.load %arg2[%c144, %c0_10] : memref<152x96xf32, #tpu.memory_space<vmem>>, vector<8x3xf32>
    %c0_11 = arith.constant 0 : index
    %c0_12 = arith.constant 0 : index
    %c0_13 = arith.constant 0 : index
    %11 = vector.load %arg0[%c0_11, %c0_12, %c0_13] : memref<3x8x16xf32, #tpu.memory_space<vmem>>, vector<3x8x16xf32>
    %12 = vector.shape_cast %11 : vector<3x8x16xf32> to vector<24x16xf32>
    %cst = arith.constant dense<0.000000e+00> : vector<24x96xf32>
    %13 = tpu.matmul %12, %0, %cst {dimension_numbers = #tpu.dot_dimension_numbers<[1], [0], [0], [1], [0, 0, 1, 1], [], []>} : vector<24x16xf32>, vector<16x96xf32>, vector<24x96xf32> -> vector<24x96xf32>
    %14 = vector.broadcast %1 : vector<1x96xf32> to vector<24x96xf32>
    %15 = arith.addf %13, %14 : vector<24x96xf32>
    %c0_14 = arith.constant 0 : index
    %c0_15 = arith.constant 0 : index
    %16 = vector.load %arg1[%c0_14, %c0_15] : memref<1x32xf32, #tpu.memory_space<vmem>>, vector<1x32xf32>
    %17 = vector.shape_cast %16 : vector<1x32xf32> to vector<1x32xf32>
    %18 = vector.broadcast %17 : vector<1x32xf32> to vector<8x32xf32>
    %19 = vector.extract_strided_slice %15 {offsets = [0, 0], sizes = [8, 96], strides = [1, 1]} : vector<24x96xf32> to vector<8x96xf32>
    %cst_16 = arith.constant dense<0.000000e+00> : vector<8x96xf32>
    %20 = tpu.matmul %18, %2, %cst_16 {dimension_numbers = #tpu.dot_dimension_numbers<[1], [0], [0], [1], [0, 0, 1, 1], [], []>} : vector<8x32xf32>, vector<32x96xf32>, vector<8x96xf32> -> vector<8x96xf32>
    %21 = vector.broadcast %3 : vector<1x96xf32> to vector<8x96xf32>
    %22 = arith.addf %20, %21 : vector<8x96xf32>
    %23 = vector.extract_strided_slice %19 {offsets = [0, 0], sizes = [8, 32], strides = [1, 1]} : vector<8x96xf32> to vector<8x32xf32>
    %24 = vector.extract_strided_slice %22 {offsets = [0, 0], sizes = [8, 32], strides = [1, 1]} : vector<8x96xf32> to vector<8x32xf32>
    %25 = arith.addf %23, %24 : vector<8x32xf32>
    %26 = arith.negf %25 : vector<8x32xf32>
    %27 = math.exp %26 : vector<8x32xf32>
    %cst_17 = arith.constant 1.000000e+00 : f32
    %28 = vector.broadcast %cst_17 : f32 to vector<8x32xf32>
    %29 = arith.addf %28, %27 : vector<8x32xf32>
    %30 = arith.divf %28, %29 : vector<8x32xf32>
    %31 = vector.extract_strided_slice %19 {offsets = [0, 32], sizes = [8, 32], strides = [1, 1]} : vector<8x96xf32> to vector<8x32xf32>
    %32 = vector.extract_strided_slice %22 {offsets = [0, 32], sizes = [8, 32], strides = [1, 1]} : vector<8x96xf32> to vector<8x32xf32>
    %33 = arith.addf %31, %32 : vector<8x32xf32>
    %34 = arith.negf %33 : vector<8x32xf32>
    %35 = math.exp %34 : vector<8x32xf32>
    %cst_18 = arith.constant 1.000000e+00 : f32
    %36 = vector.broadcast %cst_18 : f32 to vector<8x32xf32>
    %37 = arith.addf %36, %35 : vector<8x32xf32>
    %38 = arith.divf %36, %37 : vector<8x32xf32>
    %39 = vector.extract_strided_slice %19 {offsets = [0, 64], sizes = [8, 32], strides = [1, 1]} : vector<8x96xf32> to vector<8x32xf32>
    %40 = vector.extract_strided_slice %22 {offsets = [0, 64], sizes = [8, 32], strides = [1, 1]} : vector<8x96xf32> to vector<8x32xf32>
    %41 = arith.mulf %30, %40 : vector<8x32xf32>
    %42 = arith.addf %39, %41 : vector<8x32xf32>
    %43 = math.tanh %42 : vector<8x32xf32>
    %cst_19 = arith.constant 1.000000e+00 : f32
    %44 = vector.broadcast %cst_19 : f32 to vector<8x32xf32>
    %45 = arith.subf %44, %38 : vector<8x32xf32>
    %46 = arith.mulf %45, %43 : vector<8x32xf32>
    %47 = arith.mulf %38, %18 : vector<8x32xf32>
    %48 = arith.addf %46, %47 : vector<8x32xf32>
    %49 = vector.extract_strided_slice %10 {offsets = [0, 0], sizes = [8, 1], strides = [1, 1]} : vector<8x3xf32> to vector<8x1xf32>
    %cst_20 = arith.constant 5.000000e-01 : f32
    %50 = vector.broadcast %cst_20 : f32 to vector<8x1xf32>
    %51 = arith.cmpf ogt, %49, %50 : vector<8x1xf32>
    %52 = vector.shape_cast %51 : vector<8x1xi1> to vector<8x1xi1>
    %53 = vector.broadcast %52 : vector<8x1xi1> to vector<8x32xi1>
    %54 = arith.select %53, %48, %18 : vector<8x32xi1>, vector<8x32xf32>
    %55 = vector.extract_strided_slice %15 {offsets = [8, 0], sizes = [8, 96], strides = [1, 1]} : vector<24x96xf32> to vector<8x96xf32>
    %cst_21 = arith.constant dense<0.000000e+00> : vector<8x96xf32>
    %56 = tpu.matmul %54, %2, %cst_21 {dimension_numbers = #tpu.dot_dimension_numbers<[1], [0], [0], [1], [0, 0, 1, 1], [], []>} : vector<8x32xf32>, vector<32x96xf32>, vector<8x96xf32> -> vector<8x96xf32>
    %57 = vector.broadcast %3 : vector<1x96xf32> to vector<8x96xf32>
    %58 = arith.addf %56, %57 : vector<8x96xf32>
    %59 = vector.extract_strided_slice %55 {offsets = [0, 0], sizes = [8, 32], strides = [1, 1]} : vector<8x96xf32> to vector<8x32xf32>
    %60 = vector.extract_strided_slice %58 {offsets = [0, 0], sizes = [8, 32], strides = [1, 1]} : vector<8x96xf32> to vector<8x32xf32>
    %61 = arith.addf %59, %60 : vector<8x32xf32>
    %62 = arith.negf %61 : vector<8x32xf32>
    %63 = math.exp %62 : vector<8x32xf32>
    %cst_22 = arith.constant 1.000000e+00 : f32
    %64 = vector.broadcast %cst_22 : f32 to vector<8x32xf32>
    %65 = arith.addf %64, %63 : vector<8x32xf32>
    %66 = arith.divf %64, %65 : vector<8x32xf32>
    %67 = vector.extract_strided_slice %55 {offsets = [0, 32], sizes = [8, 32], strides = [1, 1]} : vector<8x96xf32> to vector<8x32xf32>
    %68 = vector.extract_strided_slice %58 {offsets = [0, 32], sizes = [8, 32], strides = [1, 1]} : vector<8x96xf32> to vector<8x32xf32>
    %69 = arith.addf %67, %68 : vector<8x32xf32>
    %70 = arith.negf %69 : vector<8x32xf32>
    %71 = math.exp %70 : vector<8x32xf32>
    %cst_23 = arith.constant 1.000000e+00 : f32
    %72 = vector.broadcast %cst_23 : f32 to vector<8x32xf32>
    %73 = arith.addf %72, %71 : vector<8x32xf32>
    %74 = arith.divf %72, %73 : vector<8x32xf32>
    %75 = vector.extract_strided_slice %55 {offsets = [0, 64], sizes = [8, 32], strides = [1, 1]} : vector<8x96xf32> to vector<8x32xf32>
    %76 = vector.extract_strided_slice %58 {offsets = [0, 64], sizes = [8, 32], strides = [1, 1]} : vector<8x96xf32> to vector<8x32xf32>
    %77 = arith.mulf %66, %76 : vector<8x32xf32>
    %78 = arith.addf %75, %77 : vector<8x32xf32>
    %79 = math.tanh %78 : vector<8x32xf32>
    %cst_24 = arith.constant 1.000000e+00 : f32
    %80 = vector.broadcast %cst_24 : f32 to vector<8x32xf32>
    %81 = arith.subf %80, %74 : vector<8x32xf32>
    %82 = arith.mulf %81, %79 : vector<8x32xf32>
    %83 = arith.mulf %74, %54 : vector<8x32xf32>
    %84 = arith.addf %82, %83 : vector<8x32xf32>
    %85 = vector.extract_strided_slice %10 {offsets = [0, 1], sizes = [8, 1], strides = [1, 1]} : vector<8x3xf32> to vector<8x1xf32>
    %cst_25 = arith.constant 5.000000e-01 : f32
    %86 = vector.broadcast %cst_25 : f32 to vector<8x1xf32>
    %87 = arith.cmpf ogt, %85, %86 : vector<8x1xf32>
    %88 = vector.shape_cast %87 : vector<8x1xi1> to vector<8x1xi1>
    %89 = vector.broadcast %88 : vector<8x1xi1> to vector<8x32xi1>
    %90 = arith.select %89, %84, %54 : vector<8x32xi1>, vector<8x32xf32>
    %91 = vector.extract_strided_slice %15 {offsets = [16, 0], sizes = [8, 96], strides = [1, 1]} : vector<24x96xf32> to vector<8x96xf32>
    %cst_26 = arith.constant dense<0.000000e+00> : vector<8x96xf32>
    %92 = tpu.matmul %90, %2, %cst_26 {dimension_numbers = #tpu.dot_dimension_numbers<[1], [0], [0], [1], [0, 0, 1, 1], [], []>} : vector<8x32xf32>, vector<32x96xf32>, vector<8x96xf32> -> vector<8x96xf32>
    %93 = vector.broadcast %3 : vector<1x96xf32> to vector<8x96xf32>
    %94 = arith.addf %92, %93 : vector<8x96xf32>
    %95 = vector.extract_strided_slice %91 {offsets = [0, 0], sizes = [8, 32], strides = [1, 1]} : vector<8x96xf32> to vector<8x32xf32>
    %96 = vector.extract_strided_slice %94 {offsets = [0, 0], sizes = [8, 32], strides = [1, 1]} : vector<8x96xf32> to vector<8x32xf32>
    %97 = arith.addf %95, %96 : vector<8x32xf32>
    %98 = arith.negf %97 : vector<8x32xf32>
    %99 = math.exp %98 : vector<8x32xf32>
    %cst_27 = arith.constant 1.000000e+00 : f32
    %100 = vector.broadcast %cst_27 : f32 to vector<8x32xf32>
    %101 = arith.addf %100, %99 : vector<8x32xf32>
    %102 = arith.divf %100, %101 : vector<8x32xf32>
    %103 = vector.extract_strided_slice %91 {offsets = [0, 32], sizes = [8, 32], strides = [1, 1]} : vector<8x96xf32> to vector<8x32xf32>
    %104 = vector.extract_strided_slice %94 {offsets = [0, 32], sizes = [8, 32], strides = [1, 1]} : vector<8x96xf32> to vector<8x32xf32>
    %105 = arith.addf %103, %104 : vector<8x32xf32>
    %106 = arith.negf %105 : vector<8x32xf32>
    %107 = math.exp %106 : vector<8x32xf32>
    %cst_28 = arith.constant 1.000000e+00 : f32
    %108 = vector.broadcast %cst_28 : f32 to vector<8x32xf32>
    %109 = arith.addf %108, %107 : vector<8x32xf32>
    %110 = arith.divf %108, %109 : vector<8x32xf32>
    %111 = vector.extract_strided_slice %91 {offsets = [0, 64], sizes = [8, 32], strides = [1, 1]} : vector<8x96xf32> to vector<8x32xf32>
    %112 = vector.extract_strided_slice %94 {offsets = [0, 64], sizes = [8, 32], strides = [1, 1]} : vector<8x96xf32> to vector<8x32xf32>
    %113 = arith.mulf %102, %112 : vector<8x32xf32>
    %114 = arith.addf %111, %113 : vector<8x32xf32>
    %115 = math.tanh %114 : vector<8x32xf32>
    %cst_29 = arith.constant 1.000000e+00 : f32
    %116 = vector.broadcast %cst_29 : f32 to vector<8x32xf32>
    %117 = arith.subf %116, %110 : vector<8x32xf32>
    %118 = arith.mulf %117, %115 : vector<8x32xf32>
    %119 = arith.mulf %110, %90 : vector<8x32xf32>
    %120 = arith.addf %118, %119 : vector<8x32xf32>
    %121 = vector.extract_strided_slice %10 {offsets = [0, 2], sizes = [8, 1], strides = [1, 1]} : vector<8x3xf32> to vector<8x1xf32>
    %cst_30 = arith.constant 5.000000e-01 : f32
    %122 = vector.broadcast %cst_30 : f32 to vector<8x1xf32>
    %123 = arith.cmpf ogt, %121, %122 : vector<8x1xf32>
    %124 = vector.shape_cast %123 : vector<8x1xi1> to vector<8x1xi1>
    %125 = vector.broadcast %124 : vector<8x1xi1> to vector<8x32xi1>
    %126 = arith.select %125, %120, %90 : vector<8x32xi1>, vector<8x32xf32>
    %cst_31 = arith.constant dense<0.000000e+00> : vector<8x32xf32>
    %127 = tpu.matmul %126, %4, %cst_31 {dimension_numbers = #tpu.dot_dimension_numbers<[1], [0], [0], [1], [0, 0, 1, 1], [], []>} : vector<8x32xf32>, vector<32x32xf32>, vector<8x32xf32> -> vector<8x32xf32>
    %128 = vector.broadcast %5 : vector<1x32xf32> to vector<8x32xf32>
    %129 = arith.addf %127, %128 : vector<8x32xf32>
    %cst_32 = arith.constant 0.000000e+00 : f32
    %130 = vector.broadcast %cst_32 : f32 to vector<8x32xf32>
    %131 = arith.maximumf %129, %130 : vector<8x32xf32>
    %cst_33 = arith.constant dense<0.000000e+00> : vector<8x32xf32>
    %132 = tpu.matmul %131, %6, %cst_33 {dimension_numbers = #tpu.dot_dimension_numbers<[1], [0], [0], [1], [0, 0, 1, 1], [], []>} : vector<8x32xf32>, vector<32x32xf32>, vector<8x32xf32> -> vector<8x32xf32>
    %133 = vector.broadcast %7 : vector<1x32xf32> to vector<8x32xf32>
    %134 = arith.addf %132, %133 : vector<8x32xf32>
    %cst_34 = arith.constant 0.000000e+00 : f32
    %135 = vector.broadcast %cst_34 : f32 to vector<8x32xf32>
    %136 = arith.maximumf %134, %135 : vector<8x32xf32>
    %cst_35 = arith.constant dense<0.000000e+00> : vector<1x8xf32>
    %137 = tpu.matmul %8, %136, %cst_35 {dimension_numbers = #tpu.dot_dimension_numbers<[1], [1], [0], [0], [0, 0, 1, 0], [], []>} : vector<1x32xf32>, vector<8x32xf32>, vector<1x8xf32> -> vector<1x8xf32>
    %138 = vector.broadcast %9 : vector<1x1xf32> to vector<1x8xf32>
    %139 = arith.addf %137, %138 : vector<1x8xf32>
    %c0_36 = arith.constant 0 : index
    %c0_37 = arith.constant 0 : index
    %140 = vector.load %arg3[%c0_36, %c0_37] : memref<1x8xf32, #tpu.memory_space<vmem>>, vector<1x8xf32>
    tpu.vector_store %arg3[%c0_36, %c0_37], %139 {strides = array<i32>} : memref<1x8xf32, #tpu.memory_space<vmem>>, vector<1x8xf32>,
    return
  }
}

</mosaic_0001>

<llo_original>
// kernel: tpu_custom_call.1
$region0: #{tpu_custom_call.1}
  #allocation0 [shape = 'u32[]', space=smem, size = 0x4, offset = 0x4, fixed_abs, tag = 'smem constant byte address 0x4 - core index']
  #allocation1 [shape = 'u32[144,128]{1,0:T(1,128)}', space=vmem, size = 0x12000, scoped, tag = 'internal scratch']
  %s0 = inlined_call_operand.hbm [shape: f32[3,8,16], index: 0, kind: input, shape index: {}]
  %s1 = inlined_call_operand.vmem [shape: f32[1,32], index: 1, kind: input, shape index: {}]
  %s2 = inlined_call_operand.hbm [shape: f32[152,96], index: 2, kind: input, shape index: {}]
  %s3 = inlined_call_operand.hbm [shape: f32[1,8], index: 3, kind: output, shape index: {}]
  %s4 = sld [smem:[#allocation0]]
  $region30: #{tpu_custom_call.1} parent=0
    _
  %s6 = ssub.s32 1, %s4
  %s7 = scalar_select 0, %s6, %s4
  $region1: #{tpu_custom_call.1} parent=0
    #allocation2 [shape = 'u8[12288]{0}', space=vmem, size = 0x3000, scoped, tag = 'input window, operand 0, single buffered']
    #allocation3 [shape = 's32[1]{0}', space=sflag, size = 0x4, scoped, tag = 'scoped memory for tpu_custom_call.1']
    #allocation4 [shape = 's32[1]{0}', space=sflag, size = 0x4, scoped, tag = 'scoped memory for tpu_custom_call.1']
    #allocation5 [shape = 'u8[77824]{0}', space=vmem, size = 0x13000, scoped, tag = 'input window, operand 2, single buffered']
    #allocation6 [shape = 's32[1]{0}', space=sflag, size = 0x4, scoped, tag = 'scoped memory for tpu_custom_call.1']
    #allocation7 [shape = 'u8[512]{0}', space=vmem, size = 0x400, scoped, tag = 'output window, operand 0, single buffered']
    %8 = vsyncpa [#allocation3], 0
    %9 = vsyncpa [#allocation6], 0
    %10 = vsyncpa [#allocation4], 0
    // Predicated region
    $region2: #{tpu_custom_call.1} parent=1 // pred_check
      _
    $region3: #{tpu_custom_call.1} parent=1 // pred_check_branch
      %12 = sbr.rel (0) target = $region5
    $region4: #{tpu_custom_call.1} parent=1 // pred_region
      %s14 = ssub.s32 384, 384
      %15 = vsyncadd [#allocation3], %s14
      %s16 = sshll.u32 [#allocation2], 4
      %s17 = int_to_ptr.vmem [resolvable:$true] %s16
      %22 = dma.hbm_to_vmem [thread:$0]  %s0, 384, %s17, [#allocation3], 128, 128, 8
    $region5: #{tpu_custom_call.1} parent=1 // pred_fallthru
      _
    // Predicated region
    $region6: #{tpu_custom_call.1} parent=1 // pred_check
      _
    $region7: #{tpu_custom_call.1} parent=1 // pred_check_branch
      %24 = sbr.rel (0) target = $region9
    $region8: #{tpu_custom_call.1} parent=1 // pred_region
      _
    $region9: #{tpu_custom_call.1} parent=1 // pred_fallthru
      _
    // Predicated region
    $region10: #{tpu_custom_call.1} parent=1 // pred_check
      _
    $region11: #{tpu_custom_call.1} parent=1 // pred_check_branch
      %26 = sbr.rel (0) target = $region13
    $region12: #{tpu_custom_call.1} parent=1 // pred_region
      %s28 = ssub.s32 2432, 2432
      %29 = vsyncadd [#allocation6], %s28
      %s30 = sshll.u32 [#allocation5], 4
      %s31 = int_to_ptr.vmem [resolvable:$true] %s30
      %36 = dma.hbm_to_vmem [thread:$0]  %s2, 2432, %s31, [#allocation6], 128, 128, 8
    $region13: #{tpu_custom_call.1} parent=1 // pred_fallthru
      _
    // Predicated region
    $region14: #{tpu_custom_call.1} parent=1 // pred_check
      _
    $region15: #{tpu_custom_call.1} parent=1 // pred_check_branch
      %38 = sbr.rel (0) target = $region17
    $region16: #{tpu_custom_call.1} parent=1 // pred_region
      %39 = dma.done [#allocation3], 384
    $region17: #{tpu_custom_call.1} parent=1 // pred_fallthru
      _
    // Predicated region
    $region18: #{tpu_custom_call.1} parent=1 // pred_check
      _
    $region19: #{tpu_custom_call.1} parent=1 // pred_check_branch
      %41 = sbr.rel (0) target = $region21
    $region20: #{tpu_custom_call.1} parent=1 // pred_region
      %42 = dma.done [#allocation6], 2432
    $region21: #{tpu_custom_call.1} parent=1 // pred_fallthru
      _
    %v43 = vld [vmem:[#allocation5] sm:$0xff]
    %v44 = vld [vmem:[#allocation5 + $0x8] sm:$0xff]
    %v45 = vld [vmem:[#allocation5 + $0x10] sm:$0x1]
    %v46 = vld [vmem:[#allocation5 + $0x18] sm:$0xff]
    %v47 = vld [vmem:[#allocation5 + $0x20] sm:$0xff]
    %v48 = vld [vmem:[#allocation5 + $0x28] sm:$0xff]
    %v49 = vld [vmem:[#allocation5 + $0x30] sm:$0xff]
    %v50 = vld [vmem:[#allocation5 + $0x38] sm:$0x1]
    %v51 = vld [vmem:[#allocation5 + $0x40] sm:$0xff]
    %v52 = vld [vmem:[#allocation5 + $0x48] sm:$0xff]
    %v53 = vld [vmem:[#allocation5 + $0x50] sm:$0xff]
    %v54 = vld [vmem:[#allocation5 + $0x58] sm:$0xff]
    %v55 = vld [vmem:[#allocation5 + $0x60] sm:$0x1]
    %v56 = vld [vmem:[#allocation5 + $0x68] sm:$0xff]
    %v57 = vld [vmem:[#allocation5 + $0x70] sm:$0xff]
    %v58 = vld [vmem:[#allocation5 + $0x78] sm:$0xff]
    %v59 = vld [vmem:[#allocation5 + $0x80] sm:$0xff]
    %v60 = vld [vmem:[#allocation5 + $0x88] sm:$0x1]
    %v61 = vld [vmem:[#allocation5 + $0x89] sm:$0x1]
    %v62 = vld [vmem:[#allocation5 + $0x8a] sm:$0x1]
    %v63 = vld [vmem:[#allocation5 + $0x90] sm:$0xff]
    %v64 = vld [vmem:[#allocation2] sm:$0xff]
    %v65 = vld [vmem:[#allocation2 + $0x8] sm:$0xff]
    %v66 = vld [vmem:[#allocation2 + $0x10] sm:$0xff]
    %v67 = vlaneseq
    %v68 = vshrl.u32 %v67, 7
    %v69 = vsub.s32 0, %v68
    %v70 = vrot.slane %v45, %v69
    %vm71 = vcmask 130048
    %v73 = vsel %vm71, %v64, 0
    %v76 = vsel %vm71, %v65, 0
    %v79 = vsel %vm71, %v66, 0
    %81 = vmatprep.subr.mxu0 0.0
    %82 = vmatpush1.msra.mxu0 %v43
    %83 = vmatprep.subr.mxu0 0.0
    %84 = vmatpush1.msra.mxu0 %v44
    %85 = vmatprep.subr.mxu0 0.0
    %86 = vmatpush1.msra.mxu0 0.0
    %87 = vmatprep.subr.mxu0 0.0
    %88 = vmatpush1.msra.mxu0 0.0
    %89 = vmatprep.subr.mxu0 0.0
    %90 = vmatpush1.msra.mxu0 0.0
    %91 = vmatprep.subr.mxu0 0.0
    %92 = vmatpush1.msra.mxu0 0.0
    %93 = vmatprep.subr.mxu0 0.0
    %94 = vmatpush1.msra.mxu0 0.0
    %95 = vmatprep.subr.mxu0 0.0
    %96 = vmatpush1.msra.mxu0 0.0
    %97 = vmatprep.subr.mxu0 0.0
    %98 = vmatpush1.msra.mxu0 0.0
    %99 = vmatprep.subr.mxu0 0.0
    %100 = vmatpush1.msra.mxu0 0.0
    %101 = vmatprep.subr.mxu0 0.0
    %102 = vmatpush1.msra.mxu0 0.0
    %103 = vmatprep.subr.mxu0 0.0
    %104 = vmatpush1.msra.mxu0 0.0
    %105 = vmatprep.subr.mxu0 0.0
    %106 = vmatpush1.msra.mxu0 0.0
    %107 = vmatprep.subr.mxu0 0.0
    %108 = vmatpush1.msra.mxu0 0.0
    %109 = vmatprep.subr.mxu0 0.0
    %110 = vmatpush1.msra.mxu0 0.0
    %111 = vmatprep.subr.mxu0 0.0
    %112 = vmatpush1.msra.mxu0 0.0
    %113 = vmatprep.subr.mxu0 0.0
    %114 = vmatpush1.msra.mxu0 0.0
    %115 = vmatprep.subr.mxu0 0.0
    %116 = vmatpush1.msra.mxu0 0.0
    %117 = vmatprep.subr.mxu0 0.0
    %118 = vmatpush1.msra.mxu0 0.0
    %119 = vmatprep.subr.mxu0 0.0
    %120 = vmatpush1.msra.mxu0 0.0
    %121 = vmatprep.subr.mxu0 0.0
    %122 = vmatpush1.msra.mxu0 0.0
    %123 = vmatprep.subr.mxu0 0.0
    %124 = vmatpush1.msra.mxu0 0.0
    %125 = vmatprep.subr.mxu0 0.0
    %126 = vmatpush1.msra.mxu0 0.0
    %127 = vmatprep.subr.mxu0 0.0
    %128 = vmatpush1.msra.mxu0 0.0
    %129 = vmatprep.subr.mxu0 0.0
    %130 = vmatpush1.msra.mxu0 0.0
    %131 = vmatprep.subr.mxu0 0.0
    %132 = vmatpush1.msra.mxu0 0.0
    %133 = vmatprep.subr.mxu0 0.0
    %134 = vmatpush1.msra.mxu0 0.0
    %135 = vmatprep.subr.mxu0 0.0
    %136 = vmatpush1.msra.mxu0 0.0
    %137 = vmatprep.subr.mxu0 0.0
    %138 = vmatpush1.msra.mxu0 0.0
    %139 = vmatprep.subr.mxu0 0.0
    %140 = vmatpush1.msra.mxu0 0.0
    %141 = vmatprep.subr.mxu0 0.0
    %142 = vmatpush1.msra.mxu0 0.0
    %143 = vmatprep.subr.mxu0 0.0
    %144 = vmatpush1.msra.mxu0 0.0
    %145 = vmatprep.mubr.f32.mxu0 0.0
    %146 = vmatmul.mubr.f32.gmra.mrb[0].mxu0 %v73
    %v147 = vpop.f32.mrb[0].mxu0
    %v148 = vadd.f32 %v70, %v147
    %v149 = vpop.f32.mrb[0].mxu0
    %150 = vmatprep.mubr.f32.mxu0 0.0
    %151 = vmatmul.mubr.f32.gmra.mrb[0].mxu0 %v76
    %v152 = vpop.f32.mrb[0].mxu0
    %v153 = vadd.f32 %v70, %v152
    %v154 = vpop.f32.mrb[0].mxu0
    %155 = vmatprep.mubr.f32.mxu0 0.0
    %156 = vmatmul.mubr.f32.gmra.mrb[0].mxu0 %v79
    %v157 = vpop.f32.mrb[0].mxu0
    %v158 = vadd.f32 %v70, %v157
    %v159 = vpop.f32.mrb[0].mxu0
    %160 = vdwg.mxu0
    %v161 = vld [vmem:[%s1] sm:$0x1]
    %v163 = vlaneseq
    %v164 = vshrl.u32 %v163, 7
    %v165 = vsub.s32 0, %v164
    %v166 = vrot.slane %v161, %v165
    %v167 = vlaneseq
    %v168 = vshrl.u32 %v167, 7
    %v169 = vsub.s32 0, %v168
    %v170 = vrot.slane %v50, %v169
    %vm171 = vcmask 261120
    %v172 = vsel %vm171, %v166, 0
    %174 = vmatprep.subr.mxu0 0.0
    %175 = vmatpush1.msra.mxu0 %v46
    %176 = vmatprep.subr.mxu0 0.0
    %177 = vmatpush1.msra.mxu0 %v47
    %178 = vmatprep.subr.mxu0 0.0
    %179 = vmatpush1.msra.mxu0 %v48
    %180 = vmatprep.subr.mxu0 0.0
    %181 = vmatpush1.msra.mxu0 %v49
    %182 = vmatprep.subr.mxu0 0.0
    %183 = vmatpush1.msra.mxu0 0.0
    %184 = vmatprep.subr.mxu0 0.0
    %185 = vmatpush1.msra.mxu0 0.0
    %186 = vmatprep.subr.mxu0 0.0
    %187 = vmatpush1.msra.mxu0 0.0
    %188 = vmatprep.subr.mxu0 0.0
    %189 = vmatpush1.msra.mxu0 0.0
    %190 = vmatprep.subr.mxu0 0.0
    %191 = vmatpush1.msra.mxu0 0.0
    %192 = vmatprep.subr.mxu0 0.0
    %193 = vmatpush1.msra.mxu0 0.0
    %194 = vmatprep.subr.mxu0 0.0
    %195 = vmatpush1.msra.mxu0 0.0
    %196 = vmatprep.subr.mxu0 0.0
    %197 = vmatpush1.msra.mxu0 0.0
    %198 = vmatprep.subr.mxu0 0.0
    %199 = vmatpush1.msra.mxu0 0.0
    %200 = vmatprep.subr.mxu0 0.0
    %201 = vmatpush1.msra.mxu0 0.0
    %202 = vmatprep.subr.mxu0 0.0
    %203 = vmatpush1.msra.mxu0 0.0
    %204 = vmatprep.subr.mxu0 0.0
    %205 = vmatpush1.msra.mxu0 0.0
    %206 = vmatprep.subr.mxu0 0.0
    %207 = vmatpush1.msra.mxu0 0.0
    %208 = vmatprep.subr.mxu0 0.0
    %209 = vmatpush1.msra.mxu0 0.0
    %210 = vmatprep.subr.mxu0 0.0
    %211 = vmatpush1.msra.mxu0 0.0
    %212 = vmatprep.subr.mxu0 0.0
    %213 = vmatpush1.msra.mxu0 0.0
    %214 = vmatprep.subr.mxu0 0.0
    %215 = vmatpush1.msra.mxu0 0.0
    %216 = vmatprep.subr.mxu0 0.0
    %217 = vmatpush1.msra.mxu0 0.0
    %218 = vmatprep.subr.mxu0 0.0
    %219 = vmatpush1.msra.mxu0 0.0
    %220 = vmatprep.subr.mxu0 0.0
    %221 = vmatpush1.msra.mxu0 0.0
    %222 = vmatprep.subr.mxu0 0.0
    %223 = vmatpush1.msra.mxu0 0.0
    %224 = vmatprep.subr.mxu0 0.0
    %225 = vmatpush1.msra.mxu0 0.0
    %226 = vmatprep.subr.mxu0 0.0
    %227 = vmatpush1.msra.mxu0 0.0
    %228 = vmatprep.subr.mxu0 0.0
    %229 = vmatpush1.msra.mxu0 0.0
    %230 = vmatprep.subr.mxu0 0.0
    %231 = vmatpush1.msra.mxu0 0.0
    %232 = vmatprep.subr.mxu0 0.0
    %233 = vmatpush1.msra.mxu0 0.0
    %234 = vmatprep.subr.mxu0 0.0
    %235 = vmatpush1.msra.mxu0 0.0
    %236 = vmatprep.subr.mxu0 0.0
    %237 = vmatpush1.msra.mxu0 0.0
    %238 = vmatprep.mubr.f32.mxu0 0.0
    %239 = vmatmul.mubr.f32.gmra.mrb[0].mxu0 %v172
    %v240 = vpop.f32.mrb[0].mxu0
    %v241 = vadd.f32 %v170, %v240
    %v242 = vpop.f32.mrb[0].mxu0
    %243 = vdwg.mxu0
    %v244 = vadd.f32 %v148, %v241
    %v245 = vxor.u32 %v244, 2147483648
    %v246 = vmul.f32 %v245, 1.442695
    %v247 = vpow.pop %v246
    %v248 = vadd.f32 %v247, 1.0
    %v249 = vrcp.pop %v248
    %v250 = vmul.f32 1.0, %v249
    %252 = vrot.lane.b32.xlu0 %v241, 64
    %v253 = vpop.permute.xlu0 %252
    %v255 = vmul.f32 %v250, %v253
    %257 = vrot.lane.b32.xlu0 %v255, 64
    %v258 = vpop.permute.xlu0 %257
    %v260 = vadd.f32 %v148, %v258
    %v261 = vtanh.pop %v260
    %v262 = vsub.f32 1.0, %v250
    %264 = vrot.lane.b32.xlu0 %v261, 96
    %v265 = vpop.permute.xlu0 %264
    %v267 = vmul.f32 %v262, %v265
    %268 = vrot.lane.b32.xlu0 %v166, 32
    %v269 = vpop.permute.xlu0 %268
    %v271 = vmul.f32 %v250, %v269
    %v272 = vadd.f32 %v267, %v271
    %vm273 = vcmp.gt.f32.partialorder %v63, 0.5
    %v274 = vsel %vm273, 1, 0
    %275 = vset.pattern.permute.xlu0 0
    %276 = vperm.xlu0 %275, %v274
    %v277 = vpop.permute.xlu0 %276
    %vm278 = vcmp.eq.s32.totalorder %v277, 1
    %v279 = vsel %vm278, %v272, %v269
    %281 = vrot.lane.b32.xlu0 %v279, 96
    %v282 = vpop.permute.xlu0 %281
    %v283 = vsel %vm171, %v282, 0
    %285 = vmatprep.subr.mxu0 0.0
    %286 = vmatpush1.msra.mxu0 %v46
    %287 = vmatprep.subr.mxu0 0.0
    %288 = vmatpush1.msra.mxu0 %v47
    %289 = vmatprep.subr.mxu0 0.0
    %290 = vmatpush1.msra.mxu0 %v48
    %291 = vmatprep.subr.mxu0 0.0
    %292 = vmatpush1.msra.mxu0 %v49
    %293 = vmatprep.subr.mxu0 0.0
    %294 = vmatpush1.msra.mxu0 0.0
    %295 = vmatprep.subr.mxu0 0.0
    %296 = vmatpush1.msra.mxu0 0.0
    %297 = vmatprep.subr.mxu0 0.0
    %298 = vmatpush1.msra.mxu0 0.0
    %299 = vmatprep.subr.mxu0 0.0
    %300 = vmatpush1.msra.mxu0 0.0
    %301 = vmatprep.subr.mxu0 0.0
    %302 = vmatpush1.msra.mxu0 0.0
    %303 = vmatprep.subr.mxu0 0.0
    %304 = vmatpush1.msra.mxu0 0.0
    %305 = vmatprep.subr.mxu0 0.0
    %306 = vmatpush1.msra.mxu0 0.0
    %307 = vmatprep.subr.mxu0 0.0
    %308 = vmatpush1.msra.mxu0 0.0
    %309 = vmatprep.subr.mxu0 0.0
    %310 = vmatpush1.msra.mxu0 0.0
    %311 = vmatprep.subr.mxu0 0.0
    %312 = vmatpush1.msra.mxu0 0.0
    %313 = vmatprep.subr.mxu0 0.0
    %314 = vmatpush1.msra.mxu0 0.0
    %315 = vmatprep.subr.mxu0 0.0
    %316 = vmatpush1.msra.mxu0 0.0
    %317 = vmatprep.subr.mxu0 0.0
    %318 = vmatpush1.msra.mxu0 0.0
    %319 = vmatprep.subr.mxu0 0.0
    %320 = vmatpush1.msra.mxu0 0.0
    %321 = vmatprep.subr.mxu0 0.0
    %322 = vmatpush1.msra.mxu0 0.0
    %323 = vmatprep.subr.mxu0 0.0
    %324 = vmatpush1.msra.mxu0 0.0
    %325 = vmatprep.subr.mxu0 0.0
    %326 = vmatpush1.msra.mxu0 0.0
    %327 = vmatprep.subr.mxu0 0.0
    %328 = vmatpush1.msra.mxu0 0.0
    %329 = vmatprep.subr.mxu0 0.0
    %330 = vmatpush1.msra.mxu0 0.0
    %331 = vmatprep.subr.mxu0 0.0
    %332 = vmatpush1.msra.mxu0 0.0
    %333 = vmatprep.subr.mxu0 0.0
    %334 = vmatpush1.msra.mxu0 0.0
    %335 = vmatprep.subr.mxu0 0.0
    %336 = vmatpush1.msra.mxu0 0.0
    %337 = vmatprep.subr.mxu0 0.0
    %338 = vmatpush1.msra.mxu0 0.0
    %339 = vmatprep.subr.mxu0 0.0
    %340 = vmatpush1.msra.mxu0 0.0
    %341 = vmatprep.subr.mxu0 0.0
    %342 = vmatpush1.msra.mxu0 0.0
    %343 = vmatprep.subr.mxu0 0.0
    %344 = vmatpush1.msra.mxu0 0.0
    %345 = vmatprep.subr.mxu0 0.0
    %346 = vmatpush1.msra.mxu0 0.0
    %347 = vmatprep.subr.mxu0 0.0
    %348 = vmatpush1.msra.mxu0 0.0
    %349 = vmatprep.mubr.f32.mxu0 0.0
    %350 = vmatmul.mubr.f32.gmra.mrb[0].mxu0 %v283
    %v351 = vpop.f32.mrb[0].mxu0
    %v352 = vadd.f32 %v170, %v351
    %v353 = vpop.f32.mrb[0].mxu0
    %354 = vdwg.mxu0
    %v355 = vadd.f32 %v153, %v352
    %v356 = vxor.u32 %v355, 2147483648
    %v357 = vmul.f32 %v356, 1.442695
    %v358 = vpow.pop %v357
    %v359 = vadd.f32 %v358, 1.0
    %v360 = vrcp.pop %v359
    %v361 = vmul.f32 1.0, %v360
    %363 = vrot.lane.b32.xlu0 %v352, 64
    %v364 = vpop.permute.xlu0 %363
    %v366 = vmul.f32 %v361, %v364
    %368 = vrot.lane.b32.xlu0 %v366, 64
    %v369 = vpop.permute.xlu0 %368
    %v371 = vadd.f32 %v153, %v369
    %v372 = vtanh.pop %v371
    %v373 = vsub.f32 1.0, %v361
    %375 = vrot.lane.b32.xlu0 %v372, 96
    %v376 = vpop.permute.xlu0 %375
    %v378 = vmul.f32 %v373, %v376
    %v379 = vmul.f32 %v361, %v279
    %v380 = vadd.f32 %v378, %v379
    %381 = vset.pattern.permute.xlu0 1
    %382 = vperm.xlu0 %381, %v274
    %v383 = vpop.permute.xlu0 %382
    %vm384 = vcmp.eq.s32.totalorder %v383, 1
    %v385 = vsel %vm384, %v380, %v279
    %387 = vrot.lane.b32.xlu0 %v385, 96
    %v388 = vpop.permute.xlu0 %387
    %v389 = vsel %vm171, %v388, 0
    %391 = vmatprep.subr.mxu0 0.0
    %392 = vmatpush1.msra.mxu0 %v46
    %393 = vmatprep.subr.mxu0 0.0
    %394 = vmatpush1.msra.mxu0 %v47
    %395 = vmatprep.subr.mxu0 0.0
    %396 = vmatpush1.msra.mxu0 %v48
    %397 = vmatprep.subr.mxu0 0.0
    %398 = vmatpush1.msra.mxu0 %v49
    %399 = vmatprep.subr.mxu0 0.0
    %400 = vmatpush1.msra.mxu0 0.0
    %401 = vmatprep.subr.mxu0 0.0
    %402 = vmatpush1.msra.mxu0 0.0
    %403 = vmatprep.subr.mxu0 0.0
    %404 = vmatpush1.msra.mxu0 0.0
    %405 = vmatprep.subr.mxu0 0.0
    %406 = vmatpush1.msra.mxu0 0.0
    %407 = vmatprep.subr.mxu0 0.0
    %408 = vmatpush1.msra.mxu0 0.0
    %409 = vmatprep.subr.mxu0 0.0
    %410 = vmatpush1.msra.mxu0 0.0
    %411 = vmatprep.subr.mxu0 0.0
    %412 = vmatpush1.msra.mxu0 0.0
    %413 = vmatprep.subr.mxu0 0.0
    %414 = vmatpush1.msra.mxu0 0.0
    %415 = vmatprep.subr.mxu0 0.0
    %416 = vmatpush1.msra.mxu0 0.0
    %417 = vmatprep.subr.mxu0 0.0
    %418 = vmatpush1.msra.mxu0 0.0
    %419 = vmatprep.subr.mxu0 0.0
    %420 = vmatpush1.msra.mxu0 0.0
    %421 = vmatprep.subr.mxu0 0.0
    %422 = vmatpush1.msra.mxu0 0.0
    %423 = vmatprep.subr.mxu0 0.0
    %424 = vmatpush1.msra.mxu0 0.0
    %425 = vmatprep.subr.mxu0 0.0
    %426 = vmatpush1.msra.mxu0 0.0
    %427 = vmatprep.subr.mxu0 0.0
    %428 = vmatpush1.msra.mxu0 0.0
    %429 = vmatprep.subr.mxu0 0.0
    %430 = vmatpush1.msra.mxu0 0.0
    %431 = vmatprep.subr.mxu0 0.0
    %432 = vmatpush1.msra.mxu0 0.0
    %433 = vmatprep.subr.mxu0 0.0
    %434 = vmatpush1.msra.mxu0 0.0
    %435 = vmatprep.subr.mxu0 0.0
    %436 = vmatpush1.msra.mxu0 0.0
    %437 = vmatprep.subr.mxu0 0.0
    %438 = vmatpush1.msra.mxu0 0.0
    %439 = vmatprep.subr.mxu0 0.0
    %440 = vmatpush1.msra.mxu0 0.0
    %441 = vmatprep.subr.mxu0 0.0
    %442 = vmatpush1.msra.mxu0 0.0
    %443 = vmatprep.subr.mxu0 0.0
    %444 = vmatpush1.msra.mxu0 0.0
    %445 = vmatprep.subr.mxu0 0.0
    %446 = vmatpush1.msra.mxu0 0.0
    %447 = vmatprep.subr.mxu0 0.0
    %448 = vmatpush1.msra.mxu0 0.0
    %449 = vmatprep.subr.mxu0 0.0
    %450 = vmatpush1.msra.mxu0 0.0
    %451 = vmatprep.subr.mxu0 0.0
    %452 = vmatpush1.msra.mxu0 0.0
    %453 = vmatprep.subr.mxu0 0.0
    %454 = vmatpush1.msra.mxu0 0.0
    %455 = vmatprep.mubr.f32.mxu0 0.0
    %456 = vmatmul.mubr.f32.gmra.mrb[0].mxu0 %v389
    %v457 = vpop.f32.mrb[0].mxu0
    %v458 = vadd.f32 %v170, %v457
    %v459 = vpop.f32.mrb[0].mxu0
    %460 = vdwg.mxu0
    %v461 = vadd.f32 %v158, %v458
    %v462 = vxor.u32 %v461, 2147483648
    %v463 = vmul.f32 %v462, 1.442695
    %v464 = vpow.pop %v463
    %v465 = vadd.f32 %v464, 1.0
    %v466 = vrcp.pop %v465
    %v467 = vmul.f32 1.0, %v466
    %469 = vrot.lane.b32.xlu0 %v458, 64
    %v470 = vpop.permute.xlu0 %469
    %v472 = vmul.f32 %v467, %v470
    %474 = vrot.lane.b32.xlu0 %v472, 64
    %v475 = vpop.permute.xlu0 %474
    %v477 = vadd.f32 %v158, %v475
    %v478 = vtanh.pop %v477
    %v479 = vsub.f32 1.0, %v467
    %481 = vrot.lane.b32.xlu0 %v478, 96
    %v482 = vpop.permute.xlu0 %481
    %v484 = vmul.f32 %v479, %v482
    %v485 = vmul.f32 %v467, %v385
    %v486 = vadd.f32 %v484, %v485
    %487 = vset.pattern.permute.xlu0 2
    %488 = vperm.xlu0 %487, %v274
    %v489 = vpop.permute.xlu0 %488
    %vm490 = vcmp.eq.s32.totalorder %v489, 1
    %v491 = vsel %vm490, %v486, %v385
    %v492 = vlaneseq
    %v493 = vshrl.u32 %v492, 7
    %v494 = vsub.s32 0, %v493
    %v495 = vrot.slane %v55, %v494
    %497 = vrot.lane.b32.xlu0 %v491, 96
    %v498 = vpop.permute.xlu0 %497
    %v499 = vsel %vm171, %v498, 0
    %501 = vmatprep.subr.mxu0 0.0
    %502 = vmatpush1.msra.mxu0 %v51
    %503 = vmatprep.subr.mxu0 0.0
    %504 = vmatpush1.msra.mxu0 %v52
    %505 = vmatprep.subr.mxu0 0.0
    %506 = vmatpush1.msra.mxu0 %v53
    %507 = vmatprep.subr.mxu0 0.0
    %508 = vmatpush1.msra.mxu0 %v54
    %509 = vmatprep.subr.mxu0 0.0
    %510 = vmatpush1.msra.mxu0 0.0
    %511 = vmatprep.subr.mxu0 0.0
    %512 = vmatpush1.msra.mxu0 0.0
    %513 = vmatprep.subr.mxu0 0.0
    %514 = vmatpush1.msra.mxu0 0.0
    %515 = vmatprep.subr.mxu0 0.0
    %516 = vmatpush1.msra.mxu0 0.0
    %517 = vmatprep.subr.mxu0 0.0
    %518 = vmatpush1.msra.mxu0 0.0
    %519 = vmatprep.subr.mxu0 0.0
    %520 = vmatpush1.msra.mxu0 0.0
    %521 = vmatprep.subr.mxu0 0.0
    %522 = vmatpush1.msra.mxu0 0.0
    %523 = vmatprep.subr.mxu0 0.0
    %524 = vmatpush1.msra.mxu0 0.0
    %525 = vmatprep.subr.mxu0 0.0
    %526 = vmatpush1.msra.mxu0 0.0
    %527 = vmatprep.subr.mxu0 0.0
    %528 = vmatpush1.msra.mxu0 0.0
    %529 = vmatprep.subr.mxu0 0.0
    %530 = vmatpush1.msra.mxu0 0.0
    %531 = vmatprep.subr.mxu0 0.0
    %532 = vmatpush1.msra.mxu0 0.0
    %533 = vmatprep.subr.mxu0 0.0
    %534 = vmatpush1.msra.mxu0 0.0
    %535 = vmatprep.subr.mxu0 0.0
    %536 = vmatpush1.msra.mxu0 0.0
    %537 = vmatprep.subr.mxu0 0.0
    %538 = vmatpush1.msra.mxu0 0.0
    %539 = vmatprep.subr.mxu0 0.0
    %540 = vmatpush1.msra.mxu0 0.0
    %541 = vmatprep.subr.mxu0 0.0
    %542 = vmatpush1.msra.mxu0 0.0
    %543 = vmatprep.subr.mxu0 0.0
    %544 = vmatpush1.msra.mxu0 0.0
    %545 = vmatprep.subr.mxu0 0.0
    %546 = vmatpush1.msra.mxu0 0.0
    %547 = vmatprep.subr.mxu0 0.0
    %548 = vmatpush1.msra.mxu0 0.0
    %549 = vmatprep.subr.mxu0 0.0
    %550 = vmatpush1.msra.mxu0 0.0
    %551 = vmatprep.subr.mxu0 0.0
    %552 = vmatpush1.msra.mxu0 0.0
    %553 = vmatprep.subr.mxu0 0.0
    %554 = vmatpush1.msra.mxu0 0.0
    %555 = vmatprep.subr.mxu0 0.0
    %556 = vmatpush1.msra.mxu0 0.0
    %557 = vmatprep.subr.mxu0 0.0
    %558 = vmatpush1.msra.mxu0 0.0
    %559 = vmatprep.subr.mxu0 0.0
    %560 = vmatpush1.msra.mxu0 0.0
    %561 = vmatprep.subr.mxu0 0.0
    %562 = vmatpush1.msra.mxu0 0.0
    %563 = vmatprep.subr.mxu0 0.0
    %564 = vmatpush1.msra.mxu0 0.0
    %565 = vmatprep.mubr.f32.mxu0 0.0
    %566 = vmatmul.mubr.f32.gmra.mrb[0].mxu0 %v499
    %v567 = vpop.f32.mrb[0].mxu0
    %v568 = vadd.f32 %v495, %v567
    %v569 = vpop.f32.mrb[0].mxu0
    %570 = vdwg.mxu0
    %v571 = vmax.f32 %v568, 0.0
    %v572 = vlaneseq
    %v573 = vshrl.u32 %v572, 7
    %v574 = vsub.s32 0, %v573
    %v575 = vrot.slane %v60, %v574
    %v577 = vsel %vm171, %v571, 0
    %579 = vmatprep.subr.mxu0 0.0
    %580 = vmatpush1.msra.mxu0 %v56
    %581 = vmatprep.subr.mxu0 0.0
    %582 = vmatpush1.msra.mxu0 %v57
    %583 = vmatprep.subr.mxu0 0.0
    %584 = vmatpush1.msra.mxu0 %v58
    %585 = vmatprep.subr.mxu0 0.0
    %586 = vmatpush1.msra.mxu0 %v59
    %587 = vmatprep.subr.mxu0 0.0
    %588 = vmatpush1.msra.mxu0 0.0
    %589 = vmatprep.subr.mxu0 0.0
    %590 = vmatpush1.msra.mxu0 0.0
    %591 = vmatprep.subr.mxu0 0.0
    %592 = vmatpush1.msra.mxu0 0.0
    %593 = vmatprep.subr.mxu0 0.0
    %594 = vmatpush1.msra.mxu0 0.0
    %595 = vmatprep.subr.mxu0 0.0
    %596 = vmatpush1.msra.mxu0 0.0
    %597 = vmatprep.subr.mxu0 0.0
    %598 = vmatpush1.msra.mxu0 0.0
    %599 = vmatprep.subr.mxu0 0.0
    %600 = vmatpush1.msra.mxu0 0.0
    %601 = vmatprep.subr.mxu0 0.0
    %602 = vmatpush1.msra.mxu0 0.0
    %603 = vmatprep.subr.mxu0 0.0
    %604 = vmatpush1.msra.mxu0 0.0
    %605 = vmatprep.subr.mxu0 0.0
    %606 = vmatpush1.msra.mxu0 0.0
    %607 = vmatprep.subr.mxu0 0.0
    %608 = vmatpush1.msra.mxu0 0.0
    %609 = vmatprep.subr.mxu0 0.0
    %610 = vmatpush1.msra.mxu0 0.0
    %611 = vmatprep.subr.mxu0 0.0
    %612 = vmatpush1.msra.mxu0 0.0
    %613 = vmatprep.subr.mxu0 0.0
    %614 = vmatpush1.msra.mxu0 0.0
    %615 = vmatprep.subr.mxu0 0.0
    %616 = vmatpush1.msra.mxu0 0.0
    %617 = vmatprep.subr.mxu0 0.0
    %618 = vmatpush1.msra.mxu0 0.0
    %619 = vmatprep.subr.mxu0 0.0
    %620 = vmatpush1.msra.mxu0 0.0
    %621 = vmatprep.subr.mxu0 0.0
    %622 = vmatpush1.msra.mxu0 0.0
    %623 = vmatprep.subr.mxu0 0.0
    %624 = vmatpush1.msra.mxu0 0.0
    %625 = vmatprep.subr.mxu0 0.0
    %626 = vmatpush1.msra.mxu0 0.0
    %627 = vmatprep.subr.mxu0 0.0
    %628 = vmatpush1.msra.mxu0 0.0
    %629 = vmatprep.subr.mxu0 0.0
    %630 = vmatpush1.msra.mxu0 0.0
    %631 = vmatprep.subr.mxu0 0.0
    %632 = vmatpush1.msra.mxu0 0.0
    %633 = vmatprep.subr.mxu0 0.0
    %634 = vmatpush1.msra.mxu0 0.0
    %635 = vmatprep.subr.mxu0 0.0
    %636 = vmatpush1.msra.mxu0 0.0
    %637 = vmatprep.subr.mxu0 0.0
    %638 = vmatpush1.msra.mxu0 0.0
    %639 = vmatprep.subr.mxu0 0.0
    %640 = vmatpush1.msra.mxu0 0.0
    %641 = vmatprep.subr.mxu0 0.0
    %642 = vmatpush1.msra.mxu0 0.0
    %643 = vmatprep.mubr.f32.mxu0 0.0
    %644 = vmatmul.mubr.f32.gmra.mrb[0].mxu0 %v577
    %v645 = vpop.f32.mrb[0].mxu0
    %v646 = vadd.f32 %v575, %v645
    %v647 = vpop.f32.mrb[0].mxu0
    %648 = vdwg.mxu0
    %v649 = vmax.f32 %v646, 0.0
    %651 = vset.pattern.permute.xlu0 0
    %652 = vperm.xlu0 %651, %v62
    %v653 = vpop.permute.xlu0 %652
    %v656 = vsel %vm171, %v61, 0
    %v659 = vsel %vm171, %v649, 0
    %661 = vmatprep.subr.mxu0 0.0
    %662 = vmatpush1.xpose.msra.mxu0 %v659
    %663 = vmatprep.subr.mxu0 0.0
    %664 = vmatpush1.xpose.msra.mxu0 0.0
    %665 = vmatprep.subr.mxu0 0.0
    %666 = vmatpush1.xpose.msra.mxu0 0.0
    %667 = vmatprep.subr.mxu0 0.0
    %668 = vmatpush1.xpose.msra.mxu0 0.0
    %669 = vmatprep.subr.mxu0 0.0
    %670 = vmatpush1.xpose.msra.mxu0 0.0
    %671 = vmatprep.subr.mxu0 0.0
    %672 = vmatpush1.xpose.msra.mxu0 0.0
    %673 = vmatprep.subr.mxu0 0.0
    %674 = vmatpush1.xpose.msra.mxu0 0.0
    %675 = vmatprep.subr.mxu0 0.0
    %676 = vmatpush1.xpose.msra.mxu0 0.0
    %677 = vmatprep.subr.mxu0 0.0
    %678 = vmatpush1.xpose.msra.mxu0 0.0
    %679 = vmatprep.subr.mxu0 0.0
    %680 = vmatpush1.xpose.msra.mxu0 0.0
    %681 = vmatprep.subr.mxu0 0.0
    %682 = vmatpush1.xpose.msra.mxu0 0.0
    %683 = vmatprep.subr.mxu0 0.0
    %684 = vmatpush1.xpose.msra.mxu0 0.0
    %685 = vmatprep.subr.mxu0 0.0
    %686 = vmatpush1.xpose.msra.mxu0 0.0
    %687 = vmatprep.subr.mxu0 0.0
    %688 = vmatpush1.xpose.msra.mxu0 0.0
    %689 = vmatprep.subr.mxu0 0.0
    %690 = vmatpush1.xpose.msra.mxu0 0.0
    %691 = vmatprep.subr.mxu0 0.0
    %692 = vmatpush1.xpose.msra.mxu0 0.0
    %693 = vmatprep.subr.mxu0 0.0
    %694 = vmatpush1.xpose.msra.mxu0 0.0
    %695 = vmatprep.subr.mxu0 0.0
    %696 = vmatpush1.xpose.msra.mxu0 0.0
    %697 = vmatprep.subr.mxu0 0.0
    %698 = vmatpush1.xpose.msra.mxu0 0.0
    %699 = vmatprep.subr.mxu0 0.0
    %700 = vmatpush1.xpose.msra.mxu0 0.0
    %701 = vmatprep.subr.mxu0 0.0
    %702 = vmatpush1.xpose.msra.mxu0 0.0
    %703 = vmatprep.subr.mxu0 0.0
    %704 = vmatpush1.xpose.msra.mxu0 0.0
    %705 = vmatprep.subr.mxu0 0.0
    %706 = vmatpush1.xpose.msra.mxu0 0.0
    %707 = vmatprep.subr.mxu0 0.0
    %708 = vmatpush1.xpose.msra.mxu0 0.0
    %709 = vmatprep.subr.mxu0 0.0
    %710 = vmatpush1.xpose.msra.mxu0 0.0
    %711 = vmatprep.subr.mxu0 0.0
    %712 = vmatpush1.xpose.msra.mxu0 0.0
    %713 = vmatprep.subr.mxu0 0.0
    %714 = vmatpush1.xpose.msra.mxu0 0.0
    %715 = vmatprep.subr.mxu0 0.0
    %716 = vmatpush1.xpose.msra.mxu0 0.0
    %717 = vmatprep.subr.mxu0 0.0
    %718 = vmatpush1.xpose.msra.mxu0 0.0
    %719 = vmatprep.subr.mxu0 0.0
    %720 = vmatpush1.xpose.msra.mxu0 0.0
    %721 = vmatprep.subr.mxu0 0.0
    %722 = vmatpush1.xpose.msra.mxu0 0.0
    %723 = vmatprep.subr.mxu0 0.0
    %724 = vmatpush1.xpose.msra.mxu0 0.0
    %725 = vmatprep.mubr.f32.mxu0 0.0
    %726 = vmatmul.mubr.f32.gmra.mrb[0].mxu0 %v656
    %v727 = vpop.f32.mrb[0].mxu0
    %v728 = vadd.f32 %v653, %v727
    %v729 = vpop.f32.mrb[0].mxu0
    %730 = vdwg.mxu0
    %vm731 = vcmask 57344
    %732 = vst.msk [vmem:[#allocation7] sm:$0x1] %vm731, %v728
    // Predicated region
    $region22: #{tpu_custom_call.1} parent=1 // pred_check
      _
    $region23: #{tpu_custom_call.1} parent=1 // pred_check_branch
      %734 = sbr.rel (0) target = $region25
    $region24: #{tpu_custom_call.1} parent=1 // pred_region
      %s736 = ssub.s32 16, 16
      %737 = vsyncadd [#allocation4], %s736
      %s739 = sshll.u32 [#allocation7], 4
      %s740 = int_to_ptr.vmem [resolvable:$true] %s739
      %742 = dma.vmem_to_hbm [thread:$0]  %s740, 16, %s3, [#allocation4]
    $region25: #{tpu_custom_call.1} parent=1 // pred_fallthru
      _
    // Predicated region
    $region26: #{tpu_custom_call.1} parent=1 // pred_check
      _
    $region27: #{tpu_custom_call.1} parent=1 // pred_check_branch
      %744 = sbr.rel (0) target = $region29
    $region28: #{tpu_custom_call.1} parent=1 // pred_region
      %745 = dma.done [#allocation4], 16
    $region29: #{tpu_custom_call.1} parent=1 // pred_fallthru
      _
    %746 = vsyncpa [#allocation3], 1
    %747 = vsyncpa [#allocation6], 1
    %748 = vsyncpa [#allocation4], 1

</llo_original>
